<compile_context>
chip_gen: v7x
topology: tpu7x:2x2x1
jax: 0.10.0
libtpu: 0.0.40
codegen_flags: <defaults>
</compile_context>

<pallas_src>
import functools

import jax
import jax.numpy as jnp
from jax.experimental import pallas as pl
from jax.experimental.pallas import tpu as pltpu


def quantum_attention_kernel(x_ref, wproj_ref, bproj_ref, wo_ref, bo_ref,
                             o_ref, qq_sc, kq_sc, v_sc, *, tq):
    Bt, S, Hp = x_ref.shape
    Qdp = qq_sc.shape[-1]
    R = Bt * S

    # --- Phase 1: single fused projection (embedding already folded in). ---
    x2d = x_ref[...].reshape(R, Hp)                                   # bf16
    proj = jnp.dot(x2d, wproj_ref[...],
                   preferred_element_type=jnp.float32) + bproj_ref[...]
    qe = jnp.tanh(proj[:, :Qdp])                                      # (R, Qdp)
    ke = jnp.tanh(proj[:, Qdp:2 * Qdp])                               # (R, Qdp)
    v = proj[:, 2 * Qdp:]                                             # (R, Hp)

    # --- Quantum-enhanced similarity stand-in: cosine similarity (f32). ---
    eps = jnp.float32(1e-8)
    qn = qe * jax.lax.rsqrt(jnp.sum(qe * qe, axis=-1, keepdims=True) + eps)
    kn = ke * jax.lax.rsqrt(jnp.sum(ke * ke, axis=-1, keepdims=True) + eps)

    qq_sc[...] = qn.reshape(Bt, S, Qdp).astype(jnp.bfloat16)
    kq_sc[...] = kn.reshape(Bt, S, Qdp).astype(jnp.bfloat16)
    v_sc[...] = v.reshape(Bt, S, Hp).astype(jnp.bfloat16)

    wo = wo_ref[...]   # hoisted: loaded once, reused by every query tile
    bo = bo_ref[...]

    # --- Phase 2: attention over query tiles (peak VMEM ~ Bt*tq*S). ---
    def attend_tile(start):
        qtile = qq_sc[:, pl.ds(start, tq), :]                         # (Bt,tq,Qdp)
        # Batched contraction on the shared last axis (no materialized kT).
        logits = jnp.einsum("bqd,bkd->bqk", qtile, kq_sc[...],
                            preferred_element_type=jnp.float32)       # (Bt,tq,S)
        # Cosine similarity is bounded in [-1, 1]: max-subtraction not needed.
        p = jnp.exp(logits)
        attn = p * pl.reciprocal(jnp.sum(p, axis=-1, keepdims=True), approx=True)
        attended = jnp.einsum("bqk,bkh->bqh", attn.astype(jnp.bfloat16),
                              v_sc[...], preferred_element_type=jnp.float32)
        out = jnp.dot(attended.reshape(Bt * tq, Hp).astype(jnp.bfloat16), wo,
                      preferred_element_type=jnp.float32) + bo
        o_ref[:, pl.ds(start, tq), :] = out.reshape(Bt, tq, Hp).astype(o_ref.dtype)

    n_qt = S // tq
    if n_qt == 1:
        attend_tile(0)
    else:
        @pl.loop(0, n_qt)
        def _(qt):
            attend_tile(pl.multiple_of(qt * tq, tq))


def _round_up(n, m):
    return (n + m - 1) // m * m


def _choose_query_tile(S, max_tq=512):
    """S itself if small; else the largest divisor of S that is a multiple of 8
    (sublane-aligned dynamic slices) and <= max_tq."""
    if S <= max_tq:
        return S
    best = None
    for d in range(8, max_tq + 1, 8):
        if S % d == 0:
            best = d
    return best if best is not None else S


def _estimate_vmem_bytes(bt, S, Hp, Qdp, tq, weight_bytes):
    """Working-set estimate for one grid step (dominant terms)."""
    x_blk = bt * S * Hp * 2 * 2                 # bf16 x block, double-buffered
    out_blk = bt * S * Hp * 4 * 2               # f32 out block, double-buffered
    proj = bt * S * (2 * Qdp + Hp) * 4          # f32 fused-projection result
    scratch = bt * S * (2 * Qdp + Hp) * 2       # bf16 q/k/v VMEM scratch
    attn = 3 * bt * tq * S * 4                  # logits / p / attn per q-tile
    attended = 2 * bt * tq * Hp * 4             # attended + out-proj tile
    weights = 2 * weight_bytes                  # default double-buffered weights
    return x_blk + out_blk + proj + scratch + attn + attended + weights


def _choose_block_b(B, S, Hp, Qdp, tq, weight_bytes, budget):
    """Largest divisor of B whose working set fits the VMEM budget, preferring a
    grid of length >= 2 so both v7x TensorCores get work."""
    divisors = [d for d in range(1, B + 1) if B % d == 0]
    fitting = [d for d in divisors
               if _estimate_vmem_bytes(d, S, Hp, Qdp, tq, weight_bytes) <= budget]
    if not fitting:
        return 1
    split_ok = [d for d in fitting if B // d >= 2]
    return max(split_ok) if split_ok else max(fitting)


def _pack_params(params, Hp, Qdp):
    """Fold quantum embedding into q/k projections, pad lane-dense, cast to bf16."""
    def pad2(w, rows, cols):
        return jnp.pad(w, ((0, rows - w.shape[0]), (0, cols - w.shape[1])))

    wqe, bqe = params["wqe"], params["bqe"]
    # Exact fold: tanh(q @ Wqe + bqe) == tanh(x @ (Wq@Wqe) + (bq@Wqe + bqe)).
    wq_f = params["wq"] @ wqe
    wk_f = params["wk"] @ wqe
    bq_f = params["bq"] @ wqe + bqe
    bk_f = params["bk"] @ wqe + bqe

    wproj = jnp.concatenate(
        [pad2(wq_f, Hp, Qdp), pad2(wk_f, Hp, Qdp), pad2(params["wv"], Hp, Hp)],
        axis=1).astype(jnp.bfloat16)                       # (Hp, 2*Qdp + Hp)
    bproj = jnp.concatenate(
        [pad2(bq_f, 1, Qdp), pad2(bk_f, 1, Qdp), pad2(params["bv"], 1, Hp)],
        axis=1).astype(jnp.float32)                        # (1, 2*Qdp + Hp)
    wo = pad2(params["wo"], Hp, Hp).astype(jnp.bfloat16)
    bo = pad2(params["bo"], 1, Hp).astype(jnp.float32)
    return wproj, bproj, wo, bo


def quantum_attention(x, params, block_b=None, max_query_tile=512):
    """x: (B, S, H) float32. params: dict of f32 weights (see init_params)."""
    B, S, H = x.shape
    Hp = _round_up(H, 128)
    Qdp = _round_up(params["wqe"].shape[1], 128)

    wproj, bproj, wo, bo = _pack_params(params, Hp, Qdp)
    nbytes = lambda a: a.size * a.dtype.itemsize
    weight_bytes = sum(nbytes(a) for a in (wproj, bproj, wo, bo))

    tq = _choose_query_tile(S, max_query_tile)

    # Generation-aware VMEM budget (v7x: 64 MiB/core; v5e/v6e: 128 MiB).
    try:
        vmem_cap = int(pltpu.get_tpu_info().vmem_capacity_bytes)
    except Exception:
        vmem_cap = 64 * 1024 * 1024   # conservative (v7x per-core) fallback
    budget = min(int(0.75 * vmem_cap), 100 * 1024 * 1024)

    if block_b is None:
        block_b = _choose_block_b(B, S, Hp, Qdp, tq, weight_bytes, budget)
    assert B % block_b == 0, "block_b must divide the batch"
    grid = (B // block_b,)

    est = _estimate_vmem_bytes(block_b, S, Hp, Qdp, tq, weight_bytes)
    vmem_limit = int(min(budget, max(16 * 1024 * 1024, int(1.5 * est))))

    xp = jnp.pad(x, ((0, 0), (0, 0), (0, Hp - H))).astype(jnp.bfloat16)

    full = lambda shape: pl.BlockSpec(shape, lambda b: (0, 0))

    out_padded = pl.pallas_call(
        functools.partial(quantum_attention_kernel, tq=tq),
        out_shape=jax.ShapeDtypeStruct((B, S, Hp), jnp.float32),
        grid_spec=pltpu.PrefetchScalarGridSpec(
            num_scalar_prefetch=0,
            grid=grid,
            in_specs=[
                pl.BlockSpec((block_b, S, Hp), lambda b: (b, 0, 0)),   # x
                full((Hp, 2 * Qdp + Hp)), full((1, 2 * Qdp + Hp)),     # wproj, bproj
                full((Hp, Hp)), full((1, Hp)),                         # wo, bo
            ],
            out_specs=pl.BlockSpec((block_b, S, Hp), lambda b: (b, 0, 0)),
            scratch_shapes=[
                pltpu.VMEM((block_b, S, Qdp), jnp.bfloat16),   # normalized q emb
                pltpu.VMEM((block_b, S, Qdp), jnp.bfloat16),   # normalized k emb
                pltpu.VMEM((block_b, S, Hp), jnp.bfloat16),    # v
            ]),
        compiler_params=pltpu.CompilerParams(
            dimension_semantics=("parallel",),
            vmem_limit_bytes=vmem_limit),
    )(xp, wproj, bproj, wo, bo)

    return out_padded[..., :H]


def init_params(key, hidden_dim, quantum_dim):
    """Deterministic synthetic parameter init (no checkpoint load), f32."""
    ks = jax.random.split(key, 6)
    s = 1.0 / jnp.sqrt(jnp.float32(hidden_dim))
    return {
        "wq": jax.random.normal(ks[0], (hidden_dim, hidden_dim), jnp.float32) * s,
        "bq": jnp.zeros((1, hidden_dim), jnp.float32),
        "wk": jax.random.normal(ks[1], (hidden_dim, hidden_dim), jnp.float32) * s,
        "bk": jnp.zeros((1, hidden_dim), jnp.float32),
        "wv": jax.random.normal(ks[2], (hidden_dim, hidden_dim), jnp.float32) * s,
        "bv": jnp.zeros((1, hidden_dim), jnp.float32),
        "wqe": jax.random.normal(ks[3], (hidden_dim, quantum_dim), jnp.float32) * s,
        "bqe": jax.random.normal(ks[4], (1, quantum_dim), jnp.float32) * 0.01,
        "wo": jax.random.normal(ks[5], (hidden_dim, hidden_dim), jnp.float32) * s,
        "bo": jnp.zeros((1, hidden_dim), jnp.float32),
    }


def quantum_attention_ref(x, p):
    """Pure-JAX f32 reference for correctness checking."""
    q = x @ p["wq"] + p["bq"]
    k = x @ p["wk"] + p["bk"]
    v = x @ p["wv"] + p["bv"]
    qq = jnp.tanh(q @ p["wqe"] + p["bqe"])
    kq = jnp.tanh(k @ p["wqe"] + p["bqe"])
    qn = qq / jnp.sqrt(jnp.sum(qq * qq, -1, keepdims=True) + 1e-8)
    kn = kq / jnp.sqrt(jnp.sum(kq * kq, -1, keepdims=True) + 1e-8)
    logits = jnp.einsum("bqd,bkd->bqk", qn, kn)
    attn = jax.nn.softmax(logits, axis=-1)
    attended = jnp.einsum("bqk,bkh->bqh", attn, v)
    return attended @ p["wo"] + p["bo"]


if __name__ == "__main__":
    # Small shapes consistent with the module: hidden=32, quantum_dim=16, seq=8, batch=2.
    B, S, H, QD = 2, 8, 32, 16
    key = jax.random.PRNGKey(0)
    kx, kp = jax.random.split(key)
    x = jax.random.normal(kx, (B, S, H), jnp.float32)
    params = init_params(kp, H, QD)

    out = quantum_attention(x, params)
    out = jax.block_until_ready(out)

    ref = quantum_attention_ref(x, params)
    assert out.shape == (B, S, H)
    # bf16 MXU operands (f32 accumulation) + approx reciprocal => loose tolerance
    # versus the all-f32 reference.
    err = float(jnp.max(jnp.abs(out - ref)))
    assert jnp.allclose(out, ref, atol=5e-2, rtol=5e-2), (
        f"mismatch vs JAX reference (max abs err = {err})")

    print("KERNEL_OK")
</pallas_src>

<mosaic_0001>
module attributes {stable_mosaic.version = 11 : i64} {
  func.func @quantum_attention_kernel(%arg0: i32, %arg1: memref<1x8x128xbf16, #tpu.memory_space<vmem>>, %arg2: memref<128x384xbf16, #tpu.memory_space<vmem>>, %arg3: memref<1x384xf32, #tpu.memory_space<vmem>>, %arg4: memref<128x128xbf16, #tpu.memory_space<vmem>>, %arg5: memref<1x128xf32, #tpu.memory_space<vmem>>, %arg6: memref<1x8x128xf32, #tpu.memory_space<vmem>>, %arg7: memref<1x8x128xbf16, #tpu.memory_space<vmem>>, %arg8: memref<1x8x128xbf16, #tpu.memory_space<vmem>>, %arg9: memref<1x8x128xbf16, #tpu.memory_space<vmem>>) attributes {dimension_semantics = [#tpu.dimension_semantics<parallel>], iteration_bounds = array<i64: 2>, scalar_prefetch = 0 : i64, scratch_operands = 3 : i64, tpu.core_type = #tpu.core_type<tc>, window_params = [{transform_indices = @transform_0, window_bounds = array<i64: 1, 8, 128>}, {pipeline_mode = #tpu.pipeline_mode<synchronous>, transform_indices = @transform_1, window_bounds = array<i64: 128, 384>}, {pipeline_mode = #tpu.pipeline_mode<synchronous>, transform_indices = @transform_2, window_bounds = array<i64: 1, 384>}, {pipeline_mode = #tpu.pipeline_mode<synchronous>, transform_indices = @transform_3, window_bounds = array<i64: 128, 128>}, {pipeline_mode = #tpu.pipeline_mode<synchronous>, transform_indices = @transform_4, window_bounds = array<i64: 1, 128>}, {transform_indices = @transform_5, window_bounds = array<i64: 1, 8, 128>}]} {
    %c0 = arith.constant 0 : index
    %c0_0 = arith.constant 0 : index
    %c0_1 = arith.constant 0 : index
    %0 = vector.load %arg1[%c0, %c0_0, %c0_1] : memref<1x8x128xbf16, #tpu.memory_space<vmem>>, vector<1x8x128xbf16>
    %1 = vector.shape_cast %0 : vector<1x8x128xbf16> to vector<8x128xbf16>
    %c0_2 = arith.constant 0 : index
    %c0_3 = arith.constant 0 : index
    %2 = vector.load %arg2[%c0_2, %c0_3] : memref<128x384xbf16, #tpu.memory_space<vmem>>, vector<128x384xbf16>
    %cst = arith.constant dense<0.000000e+00> : vector<8x384xf32>
    %3 = tpu.matmul %1, %2, %cst {dimension_numbers = #tpu.dot_dimension_numbers<[1], [0], [0], [1], [0, 0, 1, 1], [], []>} : vector<8x128xbf16>, vector<128x384xbf16>, vector<8x384xf32> -> vector<8x384xf32>
    %c0_4 = arith.constant 0 : index
    %c0_5 = arith.constant 0 : index
    %4 = vector.load %arg3[%c0_4, %c0_5] : memref<1x384xf32, #tpu.memory_space<vmem>>, vector<1x384xf32>
    %5 = vector.broadcast %4 : vector<1x384xf32> to vector<8x384xf32>
    %6 = arith.addf %3, %5 : vector<8x384xf32>
    %7 = vector.extract_strided_slice %6 {offsets = [0, 0], sizes = [8, 128], strides = [1, 1]} : vector<8x384xf32> to vector<8x128xf32>
    %8 = math.tanh %7 : vector<8x128xf32>
    %9 = vector.extract_strided_slice %6 {offsets = [0, 128], sizes = [8, 128], strides = [1, 1]} : vector<8x384xf32> to vector<8x128xf32>
    %10 = math.tanh %9 : vector<8x128xf32>
    %11 = vector.extract_strided_slice %6 {offsets = [0, 256], sizes = [8, 128], strides = [1, 1]} : vector<8x384xf32> to vector<8x128xf32>
    %12 = arith.mulf %8, %8 : vector<8x128xf32>
    %cst_6 = arith.constant dense<0.000000e+00> : vector<8xf32>
    %13 = vector.multi_reduction <add>, %12, %cst_6 [1] : vector<8x128xf32> to vector<8xf32>
    %14 = vector.shape_cast %13 : vector<8xf32> to vector<8x1xf32>
    %cst_7 = arith.constant 9.99999993E-9 : f32
    %15 = vector.broadcast %cst_7 : f32 to vector<8x1xf32>
    %16 = arith.addf %14, %15 : vector<8x1xf32>
    %17 = math.rsqrt %16 : vector<8x1xf32>
    %18 = vector.broadcast %17 : vector<8x1xf32> to vector<8x128xf32>
    %19 = arith.mulf %8, %18 : vector<8x128xf32>
    %20 = arith.mulf %10, %10 : vector<8x128xf32>
    %cst_8 = arith.constant dense<0.000000e+00> : vector<8xf32>
    %21 = vector.multi_reduction <add>, %20, %cst_8 [1] : vector<8x128xf32> to vector<8xf32>
    %22 = vector.shape_cast %21 : vector<8xf32> to vector<8x1xf32>
    %cst_9 = arith.constant 9.99999993E-9 : f32
    %23 = vector.broadcast %cst_9 : f32 to vector<8x1xf32>
    %24 = arith.addf %22, %23 : vector<8x1xf32>
    %25 = math.rsqrt %24 : vector<8x1xf32>
    %26 = vector.broadcast %25 : vector<8x1xf32> to vector<8x128xf32>
    %27 = arith.mulf %10, %26 : vector<8x128xf32>
    %28 = vector.shape_cast %19 : vector<8x128xf32> to vector<1x8x128xf32>
    %29 = arith.truncf %28 : vector<1x8x128xf32> to vector<1x8x128xbf16>
    %c0_10 = arith.constant 0 : index
    %c0_11 = arith.constant 0 : index
    %c0_12 = arith.constant 0 : index
    %30 = vector.load %arg7[%c0_10, %c0_11, %c0_12] : memref<1x8x128xbf16, #tpu.memory_space<vmem>>, vector<1x8x128xbf16>
    tpu.vector_store %arg7[%c0_10, %c0_11, %c0_12], %29 {strides = array<i32>} : memref<1x8x128xbf16, #tpu.memory_space<vmem>>, vector<1x8x128xbf16>,
    %31 = vector.shape_cast %27 : vector<8x128xf32> to vector<1x8x128xf32>
    %32 = arith.truncf %31 : vector<1x8x128xf32> to vector<1x8x128xbf16>
    %c0_13 = arith.constant 0 : index
    %c0_14 = arith.constant 0 : index
    %c0_15 = arith.constant 0 : index
    %33 = vector.load %arg8[%c0_13, %c0_14, %c0_15] : memref<1x8x128xbf16, #tpu.memory_space<vmem>>, vector<1x8x128xbf16>
    tpu.vector_store %arg8[%c0_13, %c0_14, %c0_15], %32 {strides = array<i32>} : memref<1x8x128xbf16, #tpu.memory_space<vmem>>, vector<1x8x128xbf16>,
    %34 = vector.shape_cast %11 : vector<8x128xf32> to vector<1x8x128xf32>
    %35 = arith.truncf %34 : vector<1x8x128xf32> to vector<1x8x128xbf16>
    %c0_16 = arith.constant 0 : index
    %c0_17 = arith.constant 0 : index
    %c0_18 = arith.constant 0 : index
    %36 = vector.load %arg9[%c0_16, %c0_17, %c0_18] : memref<1x8x128xbf16, #tpu.memory_space<vmem>>, vector<1x8x128xbf16>
    tpu.vector_store %arg9[%c0_16, %c0_17, %c0_18], %35 {strides = array<i32>} : memref<1x8x128xbf16, #tpu.memory_space<vmem>>, vector<1x8x128xbf16>,
    %c0_19 = arith.constant 0 : index
    %c0_20 = arith.constant 0 : index
    %37 = vector.load %arg4[%c0_19, %c0_20] : memref<128x128xbf16, #tpu.memory_space<vmem>>, vector<128x128xbf16>
    %c0_21 = arith.constant 0 : index
    %c0_22 = arith.constant 0 : index
    %38 = vector.load %arg5[%c0_21, %c0_22] : memref<1x128xf32, #tpu.memory_space<vmem>>, vector<1x128xf32>
    %c0_23 = arith.constant 0 : index
    %c0_24 = arith.constant 0 : index
    %c0_25 = arith.constant 0 : index
    %39 = vector.load %arg7[%c0_23, %c0_24, %c0_25] : memref<1x8x128xbf16, #tpu.memory_space<vmem>>, vector<1x8x128xbf16>
    %c0_26 = arith.constant 0 : index
    %c0_27 = arith.constant 0 : index
    %c0_28 = arith.constant 0 : index
    %40 = vector.load %arg8[%c0_26, %c0_27, %c0_28] : memref<1x8x128xbf16, #tpu.memory_space<vmem>>, vector<1x8x128xbf16>
    "tpu.trace_start"() <{level = 10 : i32, message = "bqd,bkd->bqk"}> : () -> ()
    %cst_29 = arith.constant dense<0.000000e+00> : vector<1x8x8xf32>
    %41 = tpu.matmul %39, %40, %cst_29 {dimension_numbers = #tpu.dot_dimension_numbers<[2], [2], [1], [1], [0, 0, 0, 1, 1, 1], [0], [0]>} : vector<1x8x128xbf16>, vector<1x8x128xbf16>, vector<1x8x8xf32> -> vector<1x8x8xf32>
    "tpu.trace_stop"() : () -> ()
    %42 = math.exp %41 : vector<1x8x8xf32>
    %cst_30 = arith.constant dense<0.000000e+00> : vector<1x8xf32>
    %43 = vector.multi_reduction <add>, %42, %cst_30 [2] : vector<1x8x8xf32> to vector<1x8xf32>
    %44 = vector.shape_cast %43 : vector<1x8xf32> to vector<1x8x1xf32>
    %45 = tpu.reciprocal %44 {approx = true} : vector<1x8x1xf32> -> vector<1x8x1xf32>
    %46 = vector.broadcast %45 : vector<1x8x1xf32> to vector<1x8x8xf32>
    %47 = arith.mulf %42, %46 : vector<1x8x8xf32>
    %48 = arith.truncf %47 : vector<1x8x8xf32> to vector<1x8x8xbf16>
    %c0_31 = arith.constant 0 : index
    %c0_32 = arith.constant 0 : index
    %c0_33 = arith.constant 0 : index
    %49 = vector.load %arg9[%c0_31, %c0_32, %c0_33] : memref<1x8x128xbf16, #tpu.memory_space<vmem>>, vector<1x8x128xbf16>
    "tpu.trace_start"() <{level = 10 : i32, message = "bqk,bkh->bqh"}> : () -> ()
    %cst_34 = arith.constant dense<0.000000e+00> : vector<1x8x128xf32>
    %50 = tpu.matmul %48, %49, %cst_34 {dimension_numbers = #tpu.dot_dimension_numbers<[2], [1], [1], [2], [0, 0, 0, 1, 1, 2], [0], [0]>} : vector<1x8x8xbf16>, vector<1x8x128xbf16>, vector<1x8x128xf32> -> vector<1x8x128xf32>
    "tpu.trace_stop"() : () -> ()
    %51 = vector.shape_cast %50 : vector<1x8x128xf32> to vector<8x128xf32>
    %52 = arith.truncf %51 : vector<8x128xf32> to vector<8x128xbf16>
    %cst_35 = arith.constant dense<0.000000e+00> : vector<8x128xf32>
    %53 = tpu.matmul %52, %37, %cst_35 {dimension_numbers = #tpu.dot_dimension_numbers<[1], [0], [0], [1], [0, 0, 1, 1], [], []>} : vector<8x128xbf16>, vector<128x128xbf16>, vector<8x128xf32> -> vector<8x128xf32>
    %54 = vector.broadcast %38 : vector<1x128xf32> to vector<8x128xf32>
    %55 = arith.addf %53, %54 : vector<8x128xf32>
    %56 = vector.shape_cast %55 : vector<8x128xf32> to vector<1x8x128xf32>
    %c0_36 = arith.constant 0 : index
    %c0_37 = arith.constant 0 : index
    %c0_38 = arith.constant 0 : index
    %57 = vector.load %arg6[%c0_36, %c0_37, %c0_38] : memref<1x8x128xf32, #tpu.memory_space<vmem>>, vector<1x8x128xf32>
    tpu.vector_store %arg6[%c0_36, %c0_37, %c0_38], %56 {strides = array<i32>} : memref<1x8x128xf32, #tpu.memory_space<vmem>>, vector<1x8x128xf32>,
    return
  }
  func.func @transform_0(%arg0: i32) -> (i32, i32, i32) {
    %c0_i32 = arith.constant 0 : i32
    %c0_i32_0 = arith.constant 0 : i32
    %c0_i32_1 = arith.constant 0 : i32
    return %arg0, %c0_i32, %c0_i32_0 : i32, i32, i32
  }
  func.func @transform_1(%arg0: i32) -> (i32, i32) {
    %c0_i32 = arith.constant 0 : i32
    %c0_i32_0 = arith.constant 0 : i32
    %c0_i32_1 = arith.constant 0 : i32
    return %c0_i32, %c0_i32_0 : i32, i32
  }
  func.func @transform_2(%arg0: i32) -> (i32, i32) {
    %c0_i32 = arith.constant 0 : i32
    %c0_i32_0 = arith.constant 0 : i32
    %c0_i32_1 = arith.constant 0 : i32
    return %c0_i32, %c0_i32_0 : i32, i32
  }
  func.func @transform_3(%arg0: i32) -> (i32, i32) {
    %c0_i32 = arith.constant 0 : i32
    %c0_i32_0 = arith.constant 0 : i32
    %c0_i32_1 = arith.constant 0 : i32
    return %c0_i32, %c0_i32_0 : i32, i32
  }
  func.func @transform_4(%arg0: i32) -> (i32, i32) {
    %c0_i32 = arith.constant 0 : i32
    %c0_i32_0 = arith.constant 0 : i32
    %c0_i32_1 = arith.constant 0 : i32
    return %c0_i32, %c0_i32_0 : i32, i32
  }
  func.func @transform_5(%arg0: i32) -> (i32, i32, i32) {
    %c0_i32 = arith.constant 0 : i32
    %c0_i32_0 = arith.constant 0 : i32
    %c0_i32_1 = arith.constant 0 : i32
    return %arg0, %c0_i32, %c0_i32_0 : i32, i32, i32
  }
}

</mosaic_0001>

<llo_original>
// kernel: tpu_custom_call.1
$region0: #{tpu_custom_call.1}
  #allocation0 [shape = 'u32[]', space=smem, size = 0x4, offset = 0x4, fixed_abs, tag = 'smem constant byte address 0x4 - core index']
  #allocation1 [shape = 'u32[144,128]{1,0:T(1,128)}', space=vmem, size = 0x12000, scoped, tag = 'internal scratch']
  #allocation2 [shape = 'bf16[1,8,128]{2,1,0:T(8,128)(2,1)}', space=vmem, size = 0x800, scoped, tag = 'scratch operand']
  #allocation3 [shape = 'bf16[1,8,128]{2,1,0:T(8,128)(2,1)}', space=vmem, size = 0x800, scoped, tag = 'scratch operand']
  #allocation4 [shape = 'bf16[1,8,128]{2,1,0:T(8,128)(2,1)}', space=vmem, size = 0x800, scoped, tag = 'scratch operand']
  %s0 = inlined_call_operand.hbm [shape: bf16[2,8,128], index: 0, kind: input, shape index: {}]
  %s1 = inlined_call_operand.hbm [shape: bf16[128,384], index: 1, kind: input, shape index: {}]
  %s2 = inlined_call_operand.vmem [shape: f32[1,384], index: 2, kind: input, shape index: {}]
  %s3 = inlined_call_operand.hbm [shape: bf16[128,128], index: 3, kind: input, shape index: {}]
  %s4 = inlined_call_operand.vmem [shape: f32[1,128], index: 4, kind: input, shape index: {}]
  %s5 = inlined_call_operand.hbm [shape: f32[2,8,128], index: 5, kind: output, shape index: {}]
  %s6 = sld [smem:[#allocation0]]
  $region65: #{tpu_custom_call.1} parent=0
    _
  %s8 = ssub.s32 1, %s6
  %s9 = scalar_select 0, %s8, %s6
  $region1: #{tpu_custom_call.1} parent=0
    #allocation5 [shape = 'u8[4096]{0}', space=vmem, size = 0x1000, scoped, tag = 'input window, operand 0']
    #allocation6 [shape = 's32[2]{0}', space=sflag, size = 0x8, scoped, tag = 'scoped memory for tpu_custom_call.1']
    #allocation7 [shape = 's32[2]{0}', space=sflag, size = 0x8, scoped, tag = 'scoped memory for tpu_custom_call.1']
    #allocation8 [shape = 'u8[98304]{0}', space=vmem, size = 0x18000, scoped, tag = 'input window, operand 1, single buffered']
    #allocation9 [shape = 's32[1]{0}', space=sflag, size = 0x4, scoped, tag = 'scoped memory for tpu_custom_call.1']
    #allocation10 [shape = 'u8[32768]{0}', space=vmem, size = 0x8000, scoped, tag = 'input window, operand 3, single buffered']
    #allocation11 [shape = 'u8[8192]{0}', space=vmem, size = 0x2000, scoped, tag = 'output window, operand 0']
    %10 = vsyncpa [#allocation6], 0
    %s11 = scalar_lea.sflag [#allocation6], 1
    %12 = vsyncpa %s11, 0
    %13 = vsyncpa [#allocation9], 0
    %14 = vsyncpa [#allocation7], 0
    %s15 = scalar_lea.sflag [#allocation7], 1
    %16 = vsyncpa %s15, 0
    loop: start=0, step=1, limit=4
    $region2: #{tpu_custom_call.1} parent=1 // loop_pre_header
      _
    $region3: #{tpu_custom_call.1} parent=1 // loop_header
      %s18 = sphi 0, %s22
      %p19 = scmp.ge.s32.totalorder %s18, 4
      %s28 = sphi 0, %s30
      %s31 = sphi 0, %s28
      %s32 = sphi 0, %s31
      %s48 = sphi 0, %s32
      %s52 = sphi 0, %s52
      %s54 = sphi 0, %s52
      %s55 = sphi 0, %s54
      %s69 = sphi 0, %s55
      %s73 = sphi 0, %s73
      %s75 = sphi 0, %s73
      %s76 = sphi 0, %s75
      %s90 = sphi 0, %s76
      %s94 = sphi 0, %s94
      %s96 = sphi 0, %s94
      %s97 = sphi 0, %s96
      %s111 = sphi 0, %s97
      %s115 = sphi 0, %s115
      %s117 = sphi 0, %s115
      %s118 = sphi 0, %s117
      %s132 = sphi 0, %s118
      %s138 = sphi 0, %s140
      %s141 = sphi 0, %s138
      %s142 = sphi 0, %s141
      %s158 = sphi 0, %s142
    $region4: #{tpu_custom_call.1} parent=1 // loop_header_branch
      %21 = sbr.rel (%p19) target = $region8
    $region5: #{tpu_custom_call.1} parent=1 // loop_body
      %s23 = ssub.s32 %s18, 1
      %s24 = ssub.s32 %s18, 2
      %s25 = sadd.s32 %s18, 1
      %s26 = ssub.s32 %s18, %s25
      %p27 = scmp.eq.s32.totalorder %s26, 0
      %s29 = sadd.s32 %s28, 1
      %s30 = scalar_select %p27, %s28, %s29
      %p33 = pneg %p27
      %p34 = scmp.eq.s32.totalorder %s18, 1
      %p35 = por %p33, %p34
      %p36 = scmp.ne.s32.totalorder %s28, %s31
      %p37 = scmp.eq.s32.totalorder %s18, 0
      %p38 = por %p36, %p37
      %p39 = scmp.ne.s32.totalorder %s28, %s31
      %p40 = scmp.eq.s32.totalorder %s23, 1
      %p41 = por %p39, %p40
      %p42 = scmp.ne.s32.totalorder %s31, %s32
      %p43 = scmp.eq.s32.totalorder %s23, 0
      %p44 = por %p42, %p43
      %p45 = scmp.ne.s32.totalorder %s31, %s32
      %p46 = scmp.eq.s32.totalorder %s24, 1
      %p47 = por %p45, %p46
      %p49 = scmp.ne.s32.totalorder %s32, %s48
      %p50 = scmp.eq.s32.totalorder %s24, 0
      %p51 = por %p49, %p50
      %s53 = sadd.s32 %s52, 1
      %p56 = scmp.eq.s32.totalorder %s18, 1
      %p57 = scmp.ne.s32.totalorder %s52, %s54
      %p58 = scmp.eq.s32.totalorder %s18, 0
      %p59 = por %p57, %p58
      %p60 = scmp.ne.s32.totalorder %s52, %s54
      %p61 = scmp.eq.s32.totalorder %s23, 1
      %p62 = por %p60, %p61
      %p63 = scmp.ne.s32.totalorder %s54, %s55
      %p64 = scmp.eq.s32.totalorder %s23, 0
      %p65 = por %p63, %p64
      %p66 = scmp.ne.s32.totalorder %s54, %s55
      %p67 = scmp.eq.s32.totalorder %s24, 1
      %p68 = por %p66, %p67
      %p70 = scmp.ne.s32.totalorder %s55, %s69
      %p71 = scmp.eq.s32.totalorder %s24, 0
      %p72 = por %p70, %p71
      %s74 = sadd.s32 %s73, 1
      %p77 = scmp.eq.s32.totalorder %s18, 1
      %p78 = scmp.ne.s32.totalorder %s73, %s75
      %p79 = scmp.eq.s32.totalorder %s18, 0
      %p80 = por %p78, %p79
      %p81 = scmp.ne.s32.totalorder %s73, %s75
      %p82 = scmp.eq.s32.totalorder %s23, 1
      %p83 = por %p81, %p82
      %p84 = scmp.ne.s32.totalorder %s75, %s76
      %p85 = scmp.eq.s32.totalorder %s23, 0
      %p86 = por %p84, %p85
      %p87 = scmp.ne.s32.totalorder %s75, %s76
      %p88 = scmp.eq.s32.totalorder %s24, 1
      %p89 = por %p87, %p88
      %p91 = scmp.ne.s32.totalorder %s76, %s90
      %p92 = scmp.eq.s32.totalorder %s24, 0
      %p93 = por %p91, %p92
      %s95 = sadd.s32 %s94, 1
      %p98 = scmp.eq.s32.totalorder %s18, 1
      %p99 = scmp.ne.s32.totalorder %s94, %s96
      %p100 = scmp.eq.s32.totalorder %s18, 0
      %p101 = por %p99, %p100
      %p102 = scmp.ne.s32.totalorder %s94, %s96
      %p103 = scmp.eq.s32.totalorder %s23, 1
      %p104 = por %p102, %p103
      %p105 = scmp.ne.s32.totalorder %s96, %s97
      %p106 = scmp.eq.s32.totalorder %s23, 0
      %p107 = por %p105, %p106
      %p108 = scmp.ne.s32.totalorder %s96, %s97
      %p109 = scmp.eq.s32.totalorder %s24, 1
      %p110 = por %p108, %p109
      %p112 = scmp.ne.s32.totalorder %s97, %s111
      %p113 = scmp.eq.s32.totalorder %s24, 0
      %p114 = por %p112, %p113
      %s116 = sadd.s32 %s115, 1
      %p119 = scmp.eq.s32.totalorder %s18, 1
      %p120 = scmp.ne.s32.totalorder %s115, %s117
      %p121 = scmp.eq.s32.totalorder %s18, 0
      %p122 = por %p120, %p121
      %p123 = scmp.ne.s32.totalorder %s115, %s117
      %p124 = scmp.eq.s32.totalorder %s23, 1
      %p125 = por %p123, %p124
      %p126 = scmp.ne.s32.totalorder %s117, %s118
      %p127 = scmp.eq.s32.totalorder %s23, 0
      %p128 = por %p126, %p127
      %p129 = scmp.ne.s32.totalorder %s117, %s118
      %p130 = scmp.eq.s32.totalorder %s24, 1
      %p131 = por %p129, %p130
      %p133 = scmp.ne.s32.totalorder %s118, %s132
      %p134 = scmp.eq.s32.totalorder %s24, 0
      %p135 = por %p133, %p134
      %s136 = ssub.s32 %s18, %s25
      %p137 = scmp.eq.s32.totalorder %s136, 0
      %s139 = sadd.s32 %s138, 1
      %s140 = scalar_select %p137, %s138, %s139
      %p143 = pneg %p137
      %p144 = scmp.eq.s32.totalorder %s18, 1
      %p145 = por %p143, %p144
      %p146 = scmp.ne.s32.totalorder %s138, %s141
      %p147 = scmp.eq.s32.totalorder %s18, 0
      %p148 = por %p146, %p147
      %p149 = scmp.ne.s32.totalorder %s138, %s141
      %p150 = scmp.eq.s32.totalorder %s23, 1
      %p151 = por %p149, %p150
      %p152 = scmp.ne.s32.totalorder %s141, %s142
      %p153 = scmp.eq.s32.totalorder %s23, 0
      %p154 = por %p152, %p153
      %p155 = scmp.ne.s32.totalorder %s141, %s142
      %p156 = scmp.eq.s32.totalorder %s24, 1
      %p157 = por %p155, %p156
      %p159 = scmp.ne.s32.totalorder %s142, %s158
      %p160 = scmp.eq.s32.totalorder %s24, 0
      %p161 = por %p159, %p160
      %p162 = scmp.le.s32.totalorder 1, %s18
      %p163 = scmp.lt.s32.totalorder %s18, 3
      %p164 = pnand %p162, %p163
      %p165 = pneg %p164
      // Predicated region
      $region9: #{tpu_custom_call.1} parent=5 // pred_check
        _
      $region10: #{tpu_custom_call.1} parent=5 // pred_check_branch
        %167 = sbr.rel (%p164) target = $region12
      $region11: #{tpu_custom_call.1} parent=5 // pred_region
        %s168 = ssub.s32 %s18, 1
        // Predicated region
        $region13: #{tpu_custom_call.1} parent=11 // pred_check
          %p169 = pneg %p65
        $region14: #{tpu_custom_call.1} parent=11 // pred_check_branch
          %171 = sbr.rel (%p169) target = $region16
        $region15: #{tpu_custom_call.1} parent=11 // pred_region
          %s173 = ssub.s32 3072, 3072
          %174 = vsyncadd [#allocation9], %s173
          %s175 = sshll.u32 [#allocation8], 4
          %s176 = int_to_ptr.vmem [resolvable:$true] %s175
          %181 = dma.hbm_to_vmem [thread:$0]  %s1, 3072, %s176, [#allocation9], 192, 192, 12
        $region16: #{tpu_custom_call.1} parent=11 // pred_fallthru
          _
        // Predicated region
        $region17: #{tpu_custom_call.1} parent=11 // pred_check
          %p182 = pneg %p86
        $region18: #{tpu_custom_call.1} parent=11 // pred_check_branch
          %184 = sbr.rel (%p182) target = $region20
        $region19: #{tpu_custom_call.1} parent=11 // pred_region
          _
        $region20: #{tpu_custom_call.1} parent=11 // pred_fallthru
          _
        // Predicated region
        $region21: #{tpu_custom_call.1} parent=11 // pred_check
          %p185 = pneg %p107
        $region22: #{tpu_custom_call.1} parent=11 // pred_check_branch
          %187 = sbr.rel (%p185) target = $region24
        $region23: #{tpu_custom_call.1} parent=11 // pred_region
          %s189 = ssub.s32 1024, 1024
          %190 = vsyncadd [#allocation9], %s189
          %s191 = sshll.u32 [#allocation10], 4
          %s192 = int_to_ptr.vmem [resolvable:$true] %s191
          %197 = dma.hbm_to_vmem [thread:$0]  %s3, 1024, %s192, [#allocation9], 64, 64, 4
        $region24: #{tpu_custom_call.1} parent=11 // pred_fallthru
          _
        // Predicated region
        $region25: #{tpu_custom_call.1} parent=11 // pred_check
          %p198 = pneg %p128
        $region26: #{tpu_custom_call.1} parent=11 // pred_check_branch
          %200 = sbr.rel (%p198) target = $region28
        $region27: #{tpu_custom_call.1} parent=11 // pred_region
          _
        $region28: #{tpu_custom_call.1} parent=11 // pred_fallthru
          _
      $region12: #{tpu_custom_call.1} parent=5 // pred_fallthru
        _
      %p201 = scmp.lt.s32.totalorder %s18, 2
      // Predicated region
      $region29: #{tpu_custom_call.1} parent=5 // pred_check
        %p202 = pneg %p201
      $region30: #{tpu_custom_call.1} parent=5 // pred_check_branch
        %204 = sbr.rel (%p202) target = $region32
      $region31: #{tpu_custom_call.1} parent=5 // pred_region
        // Predicated region
        $region33: #{tpu_custom_call.1} parent=31 // pred_check
          %p205 = pneg %p38
        $region34: #{tpu_custom_call.1} parent=31 // pred_check_branch
          %207 = sbr.rel (%p205) target = $region36
        $region35: #{tpu_custom_call.1} parent=31 // pred_region
          %s208 = sand.u32 %s28, 1
          %s209 = scalar_lea.sflag [#allocation6], %s208
          %s210 = sand.u32 %s28, 1
          %s211 = smul.addr %s210, 4
          %s212 = scalar_lea.vmem [#allocation5], %s211
          %s214 = ssub.s32 64, 64
          %215 = vsyncadd %s209, %s214
          %s216 = smul.addr %s18, 64
          %s217 = scalar_lea.hbm %s0, %s216
          %s219 = sshll.u32 %s212, 4
          %s220 = int_to_ptr.vmem [resolvable:$true] %s219
          %222 = dma.hbm_to_vmem [thread:$0]  %s217, 64, %s220, %s209
        $region36: #{tpu_custom_call.1} parent=31 // pred_fallthru
          _
      $region32: #{tpu_custom_call.1} parent=5 // pred_fallthru
        _
      %p223 = scmp.le.s32.totalorder 1, %s18
      %p224 = scmp.lt.s32.totalorder %s18, 3
      %p225 = pnand %p223, %p224
      %p226 = pneg %p225
      // Predicated region
      $region37: #{tpu_custom_call.1} parent=5 // pred_check
        _
      $region38: #{tpu_custom_call.1} parent=5 // pred_check_branch
        %228 = sbr.rel (%p225) target = $region40
      $region39: #{tpu_custom_call.1} parent=5 // pred_region
        %s229 = ssub.s32 %s18, 1
        %s230 = sand.u32 %s31, 1
        %s231 = scalar_lea.sflag [#allocation6], %s230
        %s232 = sand.u32 %s31, 1
        %s233 = smul.addr %s232, 4
        %s234 = scalar_lea.vmem [#allocation5], %s233
        // Predicated region
        $region41: #{tpu_custom_call.1} parent=39 // pred_check
          %p235 = pneg %p44
        $region42: #{tpu_custom_call.1} parent=39 // pred_check_branch
          %237 = sbr.rel (%p235) target = $region44
        $region43: #{tpu_custom_call.1} parent=39 // pred_region
          %238 = dma.done %s231, 64
        $region44: #{tpu_custom_call.1} parent=39 // pred_fallthru
          _
        // Predicated region
        $region45: #{tpu_custom_call.1} parent=39 // pred_check
          %p239 = pneg %p65
        $region46: #{tpu_custom_call.1} parent=39 // pred_check_branch
          %241 = sbr.rel (%p239) target = $region48
        $region47: #{tpu_custom_call.1} parent=39 // pred_region
          %242 = dma.done [#allocation9], 3072
        $region48: #{tpu_custom_call.1} parent=39 // pred_fallthru
          _
        // Predicated region
        $region49: #{tpu_custom_call.1} parent=39 // pred_check
          %p243 = pneg %p107
        $region50: #{tpu_custom_call.1} parent=39 // pred_check_branch
          %245 = sbr.rel (%p243) target = $region52
        $region51: #{tpu_custom_call.1} parent=39 // pred_region
          %246 = dma.done [#allocation9], 1024
        $region52: #{tpu_custom_call.1} parent=39 // pred_fallthru
          _
        %s247 = sand.u32 %s31, 1
        %s248 = scalar_lea.sflag [#allocation6], %s247
        %s249 = sand.u32 %s31, 1
        %s250 = smul.addr %s249, 4
        %s251 = scalar_lea.vmem [#allocation5], %s250
        %p252 = pneg %p44
        %p253 = pneg %p41
        %p254 = pneg %p65
        %p255 = pneg %p62
        %p256 = pneg %p86
        %p257 = pneg %p83
        %p258 = pneg %p107
        %p259 = pneg %p104
        %p260 = pneg %p128
        %p261 = pneg %p125
        %p262 = pneg %p154
        %p263 = pneg %p151
        %s264 = sand.u32 %s141, 1
        %s265 = scalar_lea.sflag [#allocation7], %s264
        %s266 = sand.u32 %s141, 1
        %s267 = smul.addr %s266, 8
        %s268 = scalar_lea.vmem [#allocation11], %s267
        %v270 = vld [vmem:[%s234] sm:$0xf]
        %v271 = vld [vmem:[#allocation8] sm:$0xff]
        %v272 = vld [vmem:[#allocation8 + $0x8] sm:$0xf]
        %v273 = vld [vmem:[#allocation8 + $0xc] sm:$0xff]
        %v274 = vld [vmem:[#allocation8 + $0x14] sm:$0xf]
        %v275 = vld [vmem:[#allocation8 + $0x18] sm:$0xff]
        %v276 = vld [vmem:[#allocation8 + $0x20] sm:$0xf]
        %v277 = vld [vmem:[#allocation8 + $0x24] sm:$0xff]
        %v278 = vld [vmem:[#allocation8 + $0x2c] sm:$0xf]
        %v279 = vld [vmem:[#allocation8 + $0x30] sm:$0xff]
        %v280 = vld [vmem:[#allocation8 + $0x38] sm:$0xf]
        %v281 = vld [vmem:[#allocation8 + $0x3c] sm:$0xff]
        %v282 = vld [vmem:[#allocation8 + $0x44] sm:$0xf]
        %v283 = vld [vmem:[#allocation8 + $0x48] sm:$0xff]
        %v284 = vld [vmem:[#allocation8 + $0x50] sm:$0xf]
        %v285 = vld [vmem:[#allocation8 + $0x54] sm:$0xff]
        %v286 = vld [vmem:[#allocation8 + $0x5c] sm:$0xf]
        %v287 = vld [vmem:[#allocation8 + $0x60] sm:$0xff]
        %v288 = vld [vmem:[#allocation8 + $0x68] sm:$0xf]
        %v289 = vld [vmem:[#allocation8 + $0x6c] sm:$0xff]
        %v290 = vld [vmem:[#allocation8 + $0x74] sm:$0xf]
        %v291 = vld [vmem:[#allocation8 + $0x78] sm:$0xff]
        %v292 = vld [vmem:[#allocation8 + $0x80] sm:$0xf]
        %v293 = vld [vmem:[#allocation8 + $0x84] sm:$0xff]
        %v294 = vld [vmem:[#allocation8 + $0x8c] sm:$0xf]
        %v295 = vld [vmem:[#allocation8 + $0x90] sm:$0xff]
        %v296 = vld [vmem:[#allocation8 + $0x98] sm:$0xf]
        %v297 = vld [vmem:[#allocation8 + $0x9c] sm:$0xff]
        %v298 = vld [vmem:[#allocation8 + $0xa4] sm:$0xf]
        %v299 = vld [vmem:[#allocation8 + $0xa8] sm:$0xff]
        %v300 = vld [vmem:[#allocation8 + $0xb0] sm:$0xf]
        %v301 = vld [vmem:[#allocation8 + $0xb4] sm:$0xff]
        %v302 = vld [vmem:[#allocation8 + $0xbc] sm:$0xf]
        %v303 = vld [vmem:[%s2] sm:$0x7]
        %v305 = vlaneseq
        %v306 = vshrl.u32 %v305, 7
        %v307 = vsub.s32 0, %v306
        %v308 = vrot.slane %v303, %v307
        %v309 = vlaneseq
        %v310 = vshrl.u32 %v309, 7
        %v311 = vsub.s32 1, %v310
        %v312 = vrot.slane %v303, %v311
        %v313 = vlaneseq
        %v314 = vshrl.u32 %v313, 7
        %v315 = vsub.s32 2, %v314
        %v316 = vrot.slane %v303, %v315
        %v352 = vunpack.c.l.b16 %v271
        %v353 = vunpack.c.h.b16 %v271
        %v354 = vunpack.c.l.b16 %v272
        %v355 = vunpack.c.l.b16 %v273
        %v356 = vunpack.c.h.b16 %v273
        %v357 = vunpack.c.l.b16 %v274
        %v358 = vunpack.c.l.b16 %v275
        %v359 = vunpack.c.h.b16 %v275
        %v360 = vunpack.c.l.b16 %v276
        %v361 = vunpack.c.l.b16 %v277
        %v362 = vunpack.c.h.b16 %v277
        %v363 = vunpack.c.l.b16 %v278
        %v364 = vunpack.c.l.b16 %v279
        %v365 = vunpack.c.h.b16 %v279
        %v366 = vunpack.c.l.b16 %v280
        %v367 = vunpack.c.l.b16 %v281
        %v368 = vunpack.c.h.b16 %v281
        %v369 = vunpack.c.l.b16 %v282
        %v370 = vunpack.c.l.b16 %v283
        %v371 = vunpack.c.h.b16 %v283
        %v372 = vunpack.c.l.b16 %v284
        %v373 = vunpack.c.l.b16 %v285
        %v374 = vunpack.c.h.b16 %v285
        %v375 = vunpack.c.l.b16 %v286
        %v376 = vunpack.c.l.b16 %v287
        %v377 = vunpack.c.h.b16 %v287
        %v378 = vunpack.c.l.b16 %v288
        %v379 = vunpack.c.l.b16 %v289
        %v380 = vunpack.c.h.b16 %v289
        %v381 = vunpack.c.l.b16 %v290
        %v382 = vunpack.c.l.b16 %v291
        %v383 = vunpack.c.h.b16 %v291
        %v384 = vunpack.c.l.b16 %v292
        %v385 = vunpack.c.l.b16 %v293
        %v386 = vunpack.c.h.b16 %v293
        %v387 = vunpack.c.l.b16 %v294
        %v388 = vunpack.c.l.b16 %v295
        %v389 = vunpack.c.h.b16 %v295
        %v390 = vunpack.c.l.b16 %v296
        %v391 = vunpack.c.l.b16 %v297
        %v392 = vunpack.c.h.b16 %v297
        %v393 = vunpack.c.l.b16 %v298
        %v394 = vunpack.c.l.b16 %v299
        %v395 = vunpack.c.h.b16 %v299
        %v396 = vunpack.c.l.b16 %v300
        %v397 = vunpack.c.l.b16 %v301
        %v398 = vunpack.c.h.b16 %v301
        %v399 = vunpack.c.l.b16 %v302
        %v400 = vpack.c.b16 %v355, %v352
        %v401 = vpack.c.b16 %v356, %v353
        %v402 = vpack.c.b16 %v357, %v354
        %v403 = vpack.c.b16 %v361, %v358
        %v404 = vpack.c.b16 %v362, %v359
        %v405 = vpack.c.b16 %v363, %v360
        %v406 = vpack.c.b16 %v367, %v364
        %v407 = vpack.c.b16 %v368, %v365
        %v408 = vpack.c.b16 %v369, %v366
        %v409 = vpack.c.b16 %v373, %v370
        %v410 = vpack.c.b16 %v374, %v371
        %v411 = vpack.c.b16 %v375, %v372
        %v412 = vpack.c.b16 %v379, %v376
        %v413 = vpack.c.b16 %v380, %v377
        %v414 = vpack.c.b16 %v381, %v378
        %v415 = vpack.c.b16 %v385, %v382
        %v416 = vpack.c.b16 %v386, %v383
        %v417 = vpack.c.b16 %v387, %v384
        %v418 = vpack.c.b16 %v391, %v388
        %v419 = vpack.c.b16 %v392, %v389
        %v420 = vpack.c.b16 %v393, %v390
        %v421 = vpack.c.b16 %v397, %v394
        %v422 = vpack.c.b16 %v398, %v395
        %v423 = vpack.c.b16 %v399, %v396
        %448 = vmatprep.subr.bf16.mxu0 %v401
        %449 = vmatpush1.bf16.msra.mxu0 %v400
        %450 = vmatprep.subr.bf16.mxu0 %v404
        %451 = vmatpush1.bf16.msra.mxu0 %v403
        %452 = vmatprep.subr.bf16.mxu0 %v407
        %453 = vmatpush1.bf16.msra.mxu0 %v406
        %454 = vmatprep.subr.bf16.mxu0 %v410
        %455 = vmatpush1.bf16.msra.mxu0 %v409
        %456 = vmatprep.subr.bf16.mxu0 %v413
        %457 = vmatpush1.bf16.msra.mxu0 %v412
        %458 = vmatprep.subr.bf16.mxu0 %v416
        %459 = vmatpush1.bf16.msra.mxu0 %v415
        %460 = vmatprep.subr.bf16.mxu0 %v419
        %461 = vmatpush1.bf16.msra.mxu0 %v418
        %462 = vmatprep.subr.bf16.mxu0 %v422
        %463 = vmatpush1.bf16.msra.mxu0 %v421
        %464 = vmatprep.subr.bf16.mxu0 0
        %465 = vmatpush1.bf16.msra.mxu0 0
        %466 = vmatprep.subr.bf16.mxu0 0
        %467 = vmatpush1.bf16.msra.mxu0 0
        %468 = vmatprep.subr.bf16.mxu0 0
        %469 = vmatpush1.bf16.msra.mxu0 0
        %470 = vmatprep.subr.bf16.mxu0 0
        %471 = vmatpush1.bf16.msra.mxu0 0
        %472 = vmatprep.subr.bf16.mxu0 0
        %473 = vmatpush1.bf16.msra.mxu0 0
        %474 = vmatprep.subr.bf16.mxu0 0
        %475 = vmatpush1.bf16.msra.mxu0 0
        %476 = vmatprep.subr.bf16.mxu0 0
        %477 = vmatpush1.bf16.msra.mxu0 0
        %478 = vmatprep.subr.bf16.mxu0 0
        %479 = vmatpush1.bf16.msra.mxu0 0
        %480 = vmatprep.mubr.bf16.mxu0 0
        %481 = vmatmul.mubr.bf16.gmra.mrb[0].mxu0 %v270
        %v482 = vpop.f32.mrb[0].mxu0
        %v483 = vadd.f32 %v308, %v482
        %v484 = vpop.f32.mrb[0].mxu0
        %v485 = vadd.f32 %v312, %v484
        %v486 = vpop.f32.mrb[0].mxu0
        %v487 = vpop.f32.mrb[0].mxu0
        %488 = vdwg.mxu0
        %489 = vmatprep.subr.bf16.mxu0 0
        %490 = vmatpush1.bf16.msra.mxu0 %v402
        %491 = vmatprep.subr.bf16.mxu0 0
        %492 = vmatpush1.bf16.msra.mxu0 %v405
        %493 = vmatprep.subr.bf16.mxu0 0
        %494 = vmatpush1.bf16.msra.mxu0 %v408
        %495 = vmatprep.subr.bf16.mxu0 0
        %496 = vmatpush1.bf16.msra.mxu0 %v411
        %497 = vmatprep.subr.bf16.mxu0 0
        %498 = vmatpush1.bf16.msra.mxu0 %v414
        %499 = vmatprep.subr.bf16.mxu0 0
        %500 = vmatpush1.bf16.msra.mxu0 %v417
        %501 = vmatprep.subr.bf16.mxu0 0
        %502 = vmatpush1.bf16.msra.mxu0 %v420
        %503 = vmatprep.subr.bf16.mxu0 0
        %504 = vmatpush1.bf16.msra.mxu0 %v423
        %505 = vmatprep.subr.bf16.mxu0 0
        %506 = vmatpush1.bf16.msra.mxu0 0
        %507 = vmatprep.subr.bf16.mxu0 0
        %508 = vmatpush1.bf16.msra.mxu0 0
        %509 = vmatprep.subr.bf16.mxu0 0
        %510 = vmatpush1.bf16.msra.mxu0 0
        %511 = vmatprep.subr.bf16.mxu0 0
        %512 = vmatpush1.bf16.msra.mxu0 0
        %513 = vmatprep.subr.bf16.mxu0 0
        %514 = vmatpush1.bf16.msra.mxu0 0
        %515 = vmatprep.subr.bf16.mxu0 0
        %516 = vmatpush1.bf16.msra.mxu0 0
        %517 = vmatprep.subr.bf16.mxu0 0
        %518 = vmatpush1.bf16.msra.mxu0 0
        %519 = vmatprep.subr.bf16.mxu0 0
        %520 = vmatpush1.bf16.msra.mxu0 0
        %521 = vmatprep.mubr.bf16.mxu0 0
        %522 = vmatmul.mubr.bf16.gmra.mrb[0].mxu0 %v270
        %v523 = vpop.f32.mrb[0].mxu0
        %v524 = vadd.f32 %v316, %v523
        %v525 = vpop.f32.mrb[0].mxu0
        %v526 = vpop.f32.mrb[0].mxu0
        %v527 = vpop.f32.mrb[0].mxu0
        %528 = vdwg.mxu0
        %v529 = vtanh.pop %v483
        %v530 = vtanh.pop %v485
        %v531 = vmul.f32 %v529, %v529
        %532 = vadd.xlane.f32.xlu0 %v531
        %v533 = vpop.xlane.xlu0 %532
        %v534 = vadd.f32 %v533, 1e-08
        %v535 = vrsqrt.pop %v534
        %v536 = vmul.f32 %v529, %v535
        %v537 = vmul.f32 %v530, %v530
        %538 = vadd.xlane.f32.xlu0 %v537
        %v539 = vpop.xlane.xlu0 %538
        %v540 = vadd.f32 %v539, 1e-08
        %v541 = vrsqrt.pop %v540
        %v542 = vmul.f32 %v530, %v541
        %v543 = vpack.c.bf16 %v536, %v536
        %544 = vst [vmem:[#allocation2] sm:$0xf] %v543
        %v545 = vpack.c.bf16 %v542, %v542
        %546 = vst [vmem:[#allocation3] sm:$0xf] %v545
        %v547 = vpack.c.bf16 %v524, %v524
        %548 = vst [vmem:[#allocation4] sm:$0xf] %v547
        %v549 = vld [vmem:[#allocation10] sm:$0xf]
        %v550 = vld [vmem:[#allocation10 + $0x4] sm:$0xf]
        %v551 = vld [vmem:[#allocation10 + $0x8] sm:$0xf]
        %v552 = vld [vmem:[#allocation10 + $0xc] sm:$0xf]
        %v553 = vld [vmem:[#allocation10 + $0x10] sm:$0xf]
        %v554 = vld [vmem:[#allocation10 + $0x14] sm:$0xf]
        %v555 = vld [vmem:[#allocation10 + $0x18] sm:$0xf]
        %v556 = vld [vmem:[#allocation10 + $0x1c] sm:$0xf]
        %v557 = vld [vmem:[#allocation10 + $0x20] sm:$0xf]
        %v558 = vld [vmem:[#allocation10 + $0x24] sm:$0xf]
        %v559 = vld [vmem:[#allocation10 + $0x28] sm:$0xf]
        %v560 = vld [vmem:[#allocation10 + $0x2c] sm:$0xf]
        %v561 = vld [vmem:[#allocation10 + $0x30] sm:$0xf]
        %v562 = vld [vmem:[#allocation10 + $0x34] sm:$0xf]
        %v563 = vld [vmem:[#allocation10 + $0x38] sm:$0xf]
        %v564 = vld [vmem:[#allocation10 + $0x3c] sm:$0xf]
        %v565 = vld [vmem:[%s4] sm:$0x1]
        %v566 = vld [vmem:[#allocation2] sm:$0xf]
        %v567 = vld [vmem:[#allocation3] sm:$0xf]
        %568 = vmatprep.subr.bf16.mxu0 0
        %569 = vmatpush1.bf16.xpose.msra.mxu0 %v567
        %570 = vmatprep.subr.bf16.mxu0 0
        %571 = vmatpush1.bf16.xpose.msra.mxu0 0
        %572 = vmatprep.subr.bf16.mxu0 0
        %573 = vmatpush1.bf16.xpose.msra.mxu0 0
        %574 = vmatprep.subr.bf16.mxu0 0
        %575 = vmatpush1.bf16.xpose.msra.mxu0 0
        %576 = vmatprep.subr.bf16.mxu0 0
        %577 = vmatpush1.bf16.xpose.msra.mxu0 0
        %578 = vmatprep.subr.bf16.mxu0 0
        %579 = vmatpush1.bf16.xpose.msra.mxu0 0
        %580 = vmatprep.subr.bf16.mxu0 0
        %581 = vmatpush1.bf16.xpose.msra.mxu0 0
        %582 = vmatprep.subr.bf16.mxu0 0
        %583 = vmatpush1.bf16.xpose.msra.mxu0 0
        %584 = vmatprep.subr.bf16.mxu0 0
        %585 = vmatpush1.bf16.xpose.msra.mxu0 0
        %586 = vmatprep.subr.bf16.mxu0 0
        %587 = vmatpush1.bf16.xpose.msra.mxu0 0
        %588 = vmatprep.subr.bf16.mxu0 0
        %589 = vmatpush1.bf16.xpose.msra.mxu0 0
        %590 = vmatprep.subr.bf16.mxu0 0
        %591 = vmatpush1.bf16.xpose.msra.mxu0 0
        %592 = vmatprep.subr.bf16.mxu0 0
        %593 = vmatpush1.bf16.xpose.msra.mxu0 0
        %594 = vmatprep.subr.bf16.mxu0 0
        %595 = vmatpush1.bf16.xpose.msra.mxu0 0
        %596 = vmatprep.subr.bf16.mxu0 0
        %597 = vmatpush1.bf16.xpose.msra.mxu0 0
        %598 = vmatprep.subr.bf16.mxu0 0
        %599 = vmatpush1.bf16.xpose.msra.mxu0 0
        %600 = vmatprep.mubr.bf16.mxu0 0
        %601 = vmatmul.mubr.bf16.gmra.mrb[0].mxu0 %v566
        %v602 = vpop.f32.mrb[0].mxu0
        %v603 = vadd.f32 0.0, %v602
        %v604 = vpop.f32.mrb[0].mxu0
        %v605 = vpop.f32.mrb[0].mxu0
        %v606 = vpop.f32.mrb[0].mxu0
        %607 = vdwg.mxu0
        %v608 = vmul.f32 %v603, 1.442695
        %v609 = vpow.pop %v608
        %vm610 = vcmask 64512
        %v611 = vsel %vm610, %v609, 0.0
        %612 = vadd.xlane.f32.xlu0 %v611
        %v613 = vpop.xlane.xlu0 %612
        %v614 = vrcp.pop %v613
        %v615 = vmul.f32 %v609, %v614
        %v616 = vpack.c.bf16 %v615, %v615
        %v617 = vld [vmem:[#allocation4] sm:$0xf]
        %v619 = vsel %vm610, %v616, 0
        %vm621 = vcmask 1043456
        %v623 = vsel %vm621, %v617, 0
        %625 = vmatprep.subr.bf16.mxu0 0
        %626 = vmatpush1.bf16.msra.mxu0 %v623
        %627 = vmatprep.subr.bf16.mxu0 0
        %628 = vmatpush1.bf16.msra.mxu0 0
        %629 = vmatprep.subr.bf16.mxu0 0
        %630 = vmatpush1.bf16.msra.mxu0 0
        %631 = vmatprep.subr.bf16.mxu0 0
        %632 = vmatpush1.bf16.msra.mxu0 0
        %633 = vmatprep.subr.bf16.mxu0 0
        %634 = vmatpush1.bf16.msra.mxu0 0
        %635 = vmatprep.subr.bf16.mxu0 0
        %636 = vmatpush1.bf16.msra.mxu0 0
        %637 = vmatprep.subr.bf16.mxu0 0
        %638 = vmatpush1.bf16.msra.mxu0 0
        %639 = vmatprep.subr.bf16.mxu0 0
        %640 = vmatpush1.bf16.msra.mxu0 0
        %641 = vmatprep.subr.bf16.mxu0 0
        %642 = vmatpush1.bf16.msra.mxu0 0
        %643 = vmatprep.subr.bf16.mxu0 0
        %644 = vmatpush1.bf16.msra.mxu0 0
        %645 = vmatprep.subr.bf16.mxu0 0
        %646 = vmatpush1.bf16.msra.mxu0 0
        %647 = vmatprep.subr.bf16.mxu0 0
        %648 = vmatpush1.bf16.msra.mxu0 0
        %649 = vmatprep.subr.bf16.mxu0 0
        %650 = vmatpush1.bf16.msra.mxu0 0
        %651 = vmatprep.subr.bf16.mxu0 0
        %652 = vmatpush1.bf16.msra.mxu0 0
        %653 = vmatprep.subr.bf16.mxu0 0
        %654 = vmatpush1.bf16.msra.mxu0 0
        %655 = vmatprep.subr.bf16.mxu0 0
        %656 = vmatpush1.bf16.msra.mxu0 0
        %657 = vmatprep.mubr.bf16.mxu0 0
        %658 = vmatmul.mubr.bf16.gmra.mrb[0].mxu0 %v619
        %v659 = vpop.f32.mrb[0].mxu0
        %v660 = vadd.f32 0.0, %v659
        %v661 = vpop.f32.mrb[0].mxu0
        %v662 = vpop.f32.mrb[0].mxu0
        %v663 = vpop.f32.mrb[0].mxu0
        %664 = vdwg.mxu0
        %v665 = vpack.c.bf16 %v660, %v660
        %v667 = vlaneseq
        %v668 = vshrl.u32 %v667, 7
        %v669 = vsub.s32 0, %v668
        %v670 = vrot.slane %v565, %v669
        %v688 = vunpack.c.l.b16 %v549
        %v689 = vunpack.c.l.b16 %v550
        %v690 = vunpack.c.l.b16 %v551
        %v691 = vunpack.c.l.b16 %v552
        %v692 = vunpack.c.l.b16 %v553
        %v693 = vunpack.c.l.b16 %v554
        %v694 = vunpack.c.l.b16 %v555
        %v695 = vunpack.c.l.b16 %v556
        %v696 = vunpack.c.l.b16 %v557
        %v697 = vunpack.c.l.b16 %v558
        %v698 = vunpack.c.l.b16 %v559
        %v699 = vunpack.c.l.b16 %v560
        %v700 = vunpack.c.l.b16 %v561
        %v701 = vunpack.c.l.b16 %v562
        %v702 = vunpack.c.l.b16 %v563
        %v703 = vunpack.c.l.b16 %v564
        %v704 = vpack.c.b16 %v689, %v688
        %v705 = vpack.c.b16 %v691, %v690
        %v706 = vpack.c.b16 %v693, %v692
        %v707 = vpack.c.b16 %v695, %v694
        %v708 = vpack.c.b16 %v697, %v696
        %v709 = vpack.c.b16 %v699, %v698
        %v710 = vpack.c.b16 %v701, %v700
        %v711 = vpack.c.b16 %v703, %v702
        %720 = vmatprep.subr.bf16.mxu0 0
        %721 = vmatpush1.bf16.msra.mxu0 %v704
        %722 = vmatprep.subr.bf16.mxu0 0
        %723 = vmatpush1.bf16.msra.mxu0 %v705
        %724 = vmatprep.subr.bf16.mxu0 0
        %725 = vmatpush1.bf16.msra.mxu0 %v706
        %726 = vmatprep.subr.bf16.mxu0 0
        %727 = vmatpush1.bf16.msra.mxu0 %v707
        %728 = vmatprep.subr.bf16.mxu0 0
        %729 = vmatpush1.bf16.msra.mxu0 %v708
        %730 = vmatprep.subr.bf16.mxu0 0
        %731 = vmatpush1.bf16.msra.mxu0 %v709
        %732 = vmatprep.subr.bf16.mxu0 0
        %733 = vmatpush1.bf16.msra.mxu0 %v710
        %734 = vmatprep.subr.bf16.mxu0 0
        %735 = vmatpush1.bf16.msra.mxu0 %v711
        %736 = vmatprep.subr.bf16.mxu0 0
        %737 = vmatpush1.bf16.msra.mxu0 0
        %738 = vmatprep.subr.bf16.mxu0 0
        %739 = vmatpush1.bf16.msra.mxu0 0
        %740 = vmatprep.subr.bf16.mxu0 0
        %741 = vmatpush1.bf16.msra.mxu0 0
        %742 = vmatprep.subr.bf16.mxu0 0
        %743 = vmatpush1.bf16.msra.mxu0 0
        %744 = vmatprep.subr.bf16.mxu0 0
        %745 = vmatpush1.bf16.msra.mxu0 0
        %746 = vmatprep.subr.bf16.mxu0 0
        %747 = vmatpush1.bf16.msra.mxu0 0
        %748 = vmatprep.subr.bf16.mxu0 0
        %749 = vmatpush1.bf16.msra.mxu0 0
        %750 = vmatprep.subr.bf16.mxu0 0
        %751 = vmatpush1.bf16.msra.mxu0 0
        %752 = vmatprep.mubr.bf16.mxu0 0
        %753 = vmatmul.mubr.bf16.gmra.mrb[0].mxu0 %v665
        %v754 = vpop.f32.mrb[0].mxu0
        %v755 = vadd.f32 %v670, %v754
        %v756 = vpop.f32.mrb[0].mxu0
        %v757 = vpop.f32.mrb[0].mxu0
        %v758 = vpop.f32.mrb[0].mxu0
        %759 = vdwg.mxu0
        %760 = vst [vmem:[%s268] sm:$0xff] %v755
        %s761 = sand.u32 %s141, 1
        %s762 = scalar_lea.sflag [#allocation7], %s761
        %s763 = sand.u32 %s141, 1
        %s764 = smul.addr %s763, 8
        %s765 = scalar_lea.vmem [#allocation11], %s764
        // Predicated region
        $region53: #{tpu_custom_call.1} parent=39 // pred_check
          %p766 = pneg %p151
        $region54: #{tpu_custom_call.1} parent=39 // pred_check_branch
          %768 = sbr.rel (%p766) target = $region56
        $region55: #{tpu_custom_call.1} parent=39 // pred_region
          %s770 = ssub.s32 128, 128
          %771 = vsyncadd %s762, %s770
          %s772 = smul.addr %s23, 128
          %s773 = scalar_lea.hbm %s5, %s772
          %s775 = sshll.u32 %s765, 4
          %s776 = int_to_ptr.vmem [resolvable:$true] %s775
          %778 = dma.vmem_to_hbm [thread:$0]  %s776, 128, %s773, %s762
        $region56: #{tpu_custom_call.1} parent=39 // pred_fallthru
          _
      $region40: #{tpu_custom_call.1} parent=5 // pred_fallthru
        _
      %p779 = scmp.le.s32.totalorder 2, %s18
      // Predicated region
      $region57: #{tpu_custom_call.1} parent=5 // pred_check
        %p780 = pneg %p779
      $region58: #{tpu_custom_call.1} parent=5 // pred_check_branch
        %782 = sbr.rel (%p780) target = $region60
      $region59: #{tpu_custom_call.1} parent=5 // pred_region
        %s783 = ssub.s32 %s18, 2
        // Predicated region
        $region61: #{tpu_custom_call.1} parent=59 // pred_check
          %p784 = pneg %p157
        $region62: #{tpu_custom_call.1} parent=59 // pred_check_branch
          %786 = sbr.rel (%p784) target = $region64
        $region63: #{tpu_custom_call.1} parent=59 // pred_region
          %s787 = sand.u32 %s142, 1
          %s788 = scalar_lea.sflag [#allocation7], %s787
          %s789 = sand.u32 %s142, 1
          %s790 = smul.addr %s789, 8
          %s791 = scalar_lea.vmem [#allocation11], %s790
          %792 = dma.done %s788, 128
        $region64: #{tpu_custom_call.1} parent=59 // pred_fallthru
          _
      $region60: #{tpu_custom_call.1} parent=5 // pred_fallthru
        _
    $region6: #{tpu_custom_call.1} parent=1 // loop_footer
      %s22 = sadd.s32 1, %s18
    $region7: #{tpu_custom_call.1} parent=1 // loop_footer_branch
      %17 = sbr.rel target = $region3
    $region8: #{tpu_custom_call.1} parent=1 // loop_exit
      _
    %793 = vsyncpa [#allocation6], 1
    %s794 = scalar_lea.sflag [#allocation6], 1
    %795 = vsyncpa %s794, 1
    %796 = vsyncpa [#allocation9], 1
    %797 = vsyncpa [#allocation7], 1
    %s798 = scalar_lea.sflag [#allocation7], 1
    %799 = vsyncpa %s798, 1

</llo_original>
